<compile_context>
chip_gen: v7x
topology: tpu7x:2x2x1
jax: 0.10.0
libtpu: 0.0.40
codegen_flags: <defaults>
</compile_context>

<pallas_src>
import functools
import numpy as np

import jax
import jax.numpy as jnp
from jax.experimental import pallas as pl
from jax.experimental.pallas import tpu as pltpu

HIGHEST = jax.lax.Precision.HIGHEST


# -----------------------------------------------------------------------------
# Fused kernel: per-N-tile
#   tokens2d : (TN*L, Cp)              f32   (rows grouped by sample)
#   dw       : (Cp, B*D)               f32   stacked (w_cloned - w_origin)
#   pc       : (Df, K*Df)              f32   stacked precision Cholesky
#   mup      : (1, K*Df)               f32   mu_k @ prec_chol_k, flattened
#   const    : (1, K)                  f32   -0.5*Df*log(2pi) + log_det + log_w
#   out      : (TN, 1)                 f32   log p(x_n)
# -----------------------------------------------------------------------------
def _fused_kernel(tok_ref, dw_ref, pc_ref, mup_ref, const_ref, out_ref,
                  *, tn, l, num_blocks, d_hidden, k_components):
    bd = num_blocks * d_hidden

    # ---- block model: cloned - origin == tokens @ dW (linearity fold) -------
    y = jnp.dot(tok_ref[...], dw_ref[...],
                preferred_element_type=jnp.float32,
                precision=HIGHEST)                       # (TN*L, B*D)
    sq = y * y                                           # VPU

    # reduce over L (sublane-split reshape; lane dim 128 unchanged)
    s = jnp.sum(sq.reshape(tn, l, bd), axis=1)           # (TN, B*D)

    # reduce over D within each block chunk -> features = -MSE, shape (TN, B)
    inv_ld = 1.0 / float(l * d_hidden)
    feat_cols = [
        (-inv_ld) * jnp.sum(s[:, b * d_hidden:(b + 1) * d_hidden],
                            axis=1, keepdims=True)
        for b in range(num_blocks)
    ]
    feat = jnp.concatenate(feat_cols, axis=1)            # (TN, B)

    # ---- GMM score_samples epilogue (sklearn full-covariance semantics) -----
    z = jnp.dot(feat, pc_ref[...],
                preferred_element_type=jnp.float32,
                precision=HIGHEST) - mup_ref[...]        # (TN, K*Df)
    zz = z * z
    maha_cols = [
        jnp.sum(zz[:, k * num_blocks:(k + 1) * num_blocks],
                axis=1, keepdims=True)
        for k in range(k_components)
    ]
    maha = jnp.concatenate(maha_cols, axis=1)            # (TN, K)
    logp = const_ref[...] - 0.5 * maha                   # (TN, K)

    m = jnp.max(logp, axis=1, keepdims=True)
    out_ref[...] = m + jnp.log(jnp.sum(jnp.exp(logp - m), axis=1, keepdims=True))


def _pick_tile_n(n, l, cp, bd, budget_bytes=16 * 1024 * 1024):
    # Per-sample footprint: double-buffered token tile + (TN*L, B*D) result.
    per_n = l * (cp + bd) * 4 * 2
    max_tn = max(1, budget_bytes // per_n)
    if n <= max_tn:
        return n
    best = None
    for cand in range(8, int(max_tn) + 1, 8):   # keep output sublane-aligned
        if n % cand == 0:
            best = cand
    return best if best is not None else n


def fused_score(tokens2d, dw_stacked, pc_stacked, mup_row, const_row,
                *, n, l, num_blocks, d_hidden, k_components):
    cp = tokens2d.shape[1]
    bd = num_blocks * d_hidden
    tn = _pick_tile_n(n, l, cp, bd)
    grid = (n // tn,)

    kern = functools.partial(_fused_kernel, tn=tn, l=l, num_blocks=num_blocks,
                             d_hidden=d_hidden, k_components=k_components)

    out = pl.pallas_call(
        kern,
        out_shape=jax.ShapeDtypeStruct((n, 1), jnp.float32),
        grid_spec=pltpu.PrefetchScalarGridSpec(
            num_scalar_prefetch=0,
            grid=grid,
            in_specs=[
                pl.BlockSpec((tn * l, cp), lambda i: (i, 0)),          # tokens tile
                pl.BlockSpec((cp, bd), lambda i: (0, 0)),              # dW stacked
                pl.BlockSpec((num_blocks, k_components * num_blocks),
                             lambda i: (0, 0)),                        # prec chol
                pl.BlockSpec((1, k_components * num_blocks),
                             lambda i: (0, 0)),                        # mu @ prec
                pl.BlockSpec((1, k_components), lambda i: (0, 0)),     # const row
            ],
            out_specs=pl.BlockSpec((tn, 1), lambda i: (i, 0)),
        ),
        compiler_params=pltpu.CompilerParams(
            dimension_semantics=("parallel",),        # shards N over 2 TCs on v7x
            vmem_limit_bytes=40 * 1024 * 1024,        # fits v5e/v6e/v7x scoped VMEM
        ),
    )(tokens2d, dw_stacked, pc_stacked, mup_row, const_row)
    return out[:, 0]


# -----------------------------------------------------------------------------
# Glue
# -----------------------------------------------------------------------------
def patchify(x, patch):
    # x: (N, C, H, W) NCHW -> tokens (N, L, C*P*P)
    n, c, h, w = x.shape
    hp, wp = h // patch, w // patch
    x = x.reshape(n, c, hp, patch, wp, patch)
    x = jnp.transpose(x, (0, 2, 4, 1, 3, 5))
    return x.reshape(n, hp * wp, c * patch * patch)


def wrap_model_2_forward(x, params, patch):
    tokens = patchify(x, patch)                                  # (N, L, Cp)
    n, l, cp = tokens.shape
    b, _, d = params["w_origin"].shape
    k = params["prec_chol"].shape[0]

    # Fold the two heads (cloned - origin) and stack all blocks lane-wise.
    dw = params["w_cloned"] - params["w_origin"]                 # (B, Cp, D)
    dw_stacked = jnp.transpose(dw, (1, 0, 2)).reshape(cp, b * d)  # (Cp, B*D)

    # Stack GMM precision-Cholesky factors: pc_stacked[d, k*Df+e] = prec_chol[k,d,e]
    pc_stacked = jnp.transpose(params["prec_chol"], (1, 0, 2)).reshape(b, k * b)
    mup_row = params["mu_prec"].reshape(1, k * b)                # (1, K*Df)
    const_row = (-0.5 * float(b) * float(np.log(2.0 * np.pi))
                 + params["log_det"] + params["log_weights"]).reshape(1, k)

    tokens2d = tokens.reshape(n * l, cp)
    return fused_score(tokens2d, dw_stacked, pc_stacked, mup_row,
                       const_row.astype(jnp.float32),
                       n=n, l=l, num_blocks=b, d_hidden=d, k_components=k)


def reference_forward(x, params, patch):
    tokens = patchify(x, patch)
    o = jnp.einsum("nlc,bcd->bnld", tokens, params["w_origin"], precision=HIGHEST)
    c = jnp.einsum("nlc,bcd->bnld", tokens, params["w_cloned"], precision=HIGHEST)
    loss = jnp.mean((c - o) ** 2, axis=(2, 3))          # (B, N)
    feat = -loss.T                                      # (N, B)
    d = feat.shape[1]
    y = (jnp.einsum("nd,kde->nke", feat, params["prec_chol"], precision=HIGHEST)
         - params["mu_prec"][None])
    maha = jnp.sum(y * y, axis=-1)
    logp = -0.5 * (d * np.log(2.0 * np.pi) + maha) + params["log_det"][None]
    return jax.scipy.special.logsumexp(logp + params["log_weights"][None], axis=1)


if __name__ == "__main__":
    # Small shapes consistent with the forward:
    N, C, H, W = 2, 4, 16, 16       # image batch (NCHW)
    P = 4                           # patch size -> L = 16 tokens, Cp = 64
    D = 32                          # block hidden dim
    NUM_BLOCKS = 4                  # feature dim of GMM
    K = 3                           # GMM components
    L, CP = (H // P) * (W // P), C * P * P

    key = jax.random.PRNGKey(0)
    kx, kwo, kwc, kmu, kcov, kw = jax.random.split(key, 6)

    x = jax.random.normal(kx, (N, C, H, W), jnp.float32)

    # Synthetic inner model: per-block origin head + (perturbed) cloned head.
    w_origin = 0.1 * jax.random.normal(kwo, (NUM_BLOCKS, CP, D), jnp.float32)
    w_cloned = w_origin + 0.05 * jax.random.normal(kwc, (NUM_BLOCKS, CP, D), jnp.float32)

    # Synthetic fitted GMM parameters (full covariance).
    # TODO(synk): GMM *fitting* (EM) is out of scope; only score_samples is kernelized.
    means = 0.5 * jax.random.normal(kmu, (K, NUM_BLOCKS), jnp.float32)
    a = 0.3 * jax.random.normal(kcov, (K, NUM_BLOCKS, NUM_BLOCKS), jnp.float32)
    cov = jnp.einsum("kij,klj->kil", a, a) + 0.5 * jnp.eye(NUM_BLOCKS)[None]
    cov_chol = jnp.linalg.cholesky(cov)
    eye = jnp.broadcast_to(jnp.eye(NUM_BLOCKS, dtype=jnp.float32),
                           (K, NUM_BLOCKS, NUM_BLOCKS))
    prec_chol = jnp.swapaxes(
        jax.scipy.linalg.solve_triangular(cov_chol, eye, lower=True), -1, -2)
    mu_prec = jnp.einsum("kd,kde->ke", means, prec_chol, precision=HIGHEST)
    log_det = jnp.sum(jnp.log(jnp.diagonal(prec_chol, axis1=1, axis2=2)), axis=1)
    weights = jax.nn.softmax(jax.random.normal(kw, (K,), jnp.float32))
    log_weights = jnp.log(weights)

    params = dict(
        w_origin=w_origin, w_cloned=w_cloned,
        prec_chol=prec_chol.astype(jnp.float32),
        mu_prec=mu_prec.astype(jnp.float32),
        log_det=log_det.astype(jnp.float32),
        log_weights=log_weights.astype(jnp.float32),
    )

    out = wrap_model_2_forward(x, params, P)
    out = jax.block_until_ready(out)

    ref = jax.block_until_ready(reference_forward(x, params, P))
    np.testing.assert_allclose(np.asarray(out), np.asarray(ref),
                               rtol=1e-3, atol=1e-3)
    assert out.shape == (N,)
    print("KERNEL_OK")
</pallas_src>

<mosaic_0001>
module attributes {stable_mosaic.version = 11 : i64} {
  func.func @_fused_kernel(%arg0: i32, %arg1: memref<32x64xf32, #tpu.memory_space<vmem>>, %arg2: memref<64x128xf32, #tpu.memory_space<vmem>>, %arg3: memref<4x12xf32, #tpu.memory_space<vmem>>, %arg4: memref<1x12xf32, #tpu.memory_space<vmem>>, %arg5: memref<1x3xf32, #tpu.memory_space<vmem>>, %arg6: memref<2x1xf32, #tpu.memory_space<vmem>>) attributes {dimension_semantics = [#tpu.dimension_semantics<parallel>], iteration_bounds = array<i64: 1>, scalar_prefetch = 0 : i64, scratch_operands = 0 : i64, tpu.core_type = #tpu.core_type<tc>, window_params = [{transform_indices = @transform_0, window_bounds = array<i64: 32, 64>}, {pipeline_mode = #tpu.pipeline_mode<synchronous>, transform_indices = @transform_1, window_bounds = array<i64: 64, 128>}, {pipeline_mode = #tpu.pipeline_mode<synchronous>, transform_indices = @transform_2, window_bounds = array<i64: 4, 12>}, {pipeline_mode = #tpu.pipeline_mode<synchronous>, transform_indices = @transform_3, window_bounds = array<i64: 1, 12>}, {pipeline_mode = #tpu.pipeline_mode<synchronous>, transform_indices = @transform_4, window_bounds = array<i64: 1, 3>}, {transform_indices = @transform_5, window_bounds = array<i64: 2, 1>}]} {
    %c0 = arith.constant 0 : index
    %c0_0 = arith.constant 0 : index
    %0 = vector.load %arg1[%c0, %c0_0] : memref<32x64xf32, #tpu.memory_space<vmem>>, vector<32x64xf32>
    %c0_1 = arith.constant 0 : index
    %c0_2 = arith.constant 0 : index
    %1 = vector.load %arg2[%c0_1, %c0_2] : memref<64x128xf32, #tpu.memory_space<vmem>>, vector<64x128xf32>
    %cst = arith.constant dense<0.000000e+00> : vector<32x128xf32>
    %2 = tpu.matmul %0, %1, %cst {dimension_numbers = #tpu.dot_dimension_numbers<[1], [0], [0], [1], [0, 0, 1, 1], [], []>, precision = #tpu.contract_precision<fp32>} : vector<32x64xf32>, vector<64x128xf32>, vector<32x128xf32> -> vector<32x128xf32>
    %3 = arith.mulf %2, %2 : vector<32x128xf32>
    %4 = vector.shape_cast %3 : vector<32x128xf32> to vector<2x16x128xf32>
    %cst_3 = arith.constant dense<0.000000e+00> : vector<2x128xf32>
    %5 = vector.multi_reduction <add>, %4, %cst_3 [1] : vector<2x16x128xf32> to vector<2x128xf32>
    %6 = vector.extract_strided_slice %5 {offsets = [0, 0], sizes = [2, 32], strides = [1, 1]} : vector<2x128xf32> to vector<2x32xf32>
    %cst_4 = arith.constant dense<0.000000e+00> : vector<2xf32>
    %7 = vector.multi_reduction <add>, %6, %cst_4 [1] : vector<2x32xf32> to vector<2xf32>
    %8 = vector.shape_cast %7 : vector<2xf32> to vector<2x1xf32>
    %cst_5 = arith.constant -0.001953125 : f32
    %9 = vector.broadcast %cst_5 : f32 to vector<2x1xf32>
    %10 = arith.mulf %9, %8 : vector<2x1xf32>
    %11 = vector.extract_strided_slice %5 {offsets = [0, 32], sizes = [2, 32], strides = [1, 1]} : vector<2x128xf32> to vector<2x32xf32>
    %cst_6 = arith.constant dense<0.000000e+00> : vector<2xf32>
    %12 = vector.multi_reduction <add>, %11, %cst_6 [1] : vector<2x32xf32> to vector<2xf32>
    %13 = vector.shape_cast %12 : vector<2xf32> to vector<2x1xf32>
    %cst_7 = arith.constant -0.001953125 : f32
    %14 = vector.broadcast %cst_7 : f32 to vector<2x1xf32>
    %15 = arith.mulf %14, %13 : vector<2x1xf32>
    %16 = vector.extract_strided_slice %5 {offsets = [0, 64], sizes = [2, 32], strides = [1, 1]} : vector<2x128xf32> to vector<2x32xf32>
    %cst_8 = arith.constant dense<0.000000e+00> : vector<2xf32>
    %17 = vector.multi_reduction <add>, %16, %cst_8 [1] : vector<2x32xf32> to vector<2xf32>
    %18 = vector.shape_cast %17 : vector<2xf32> to vector<2x1xf32>
    %cst_9 = arith.constant -0.001953125 : f32
    %19 = vector.broadcast %cst_9 : f32 to vector<2x1xf32>
    %20 = arith.mulf %19, %18 : vector<2x1xf32>
    %21 = vector.extract_strided_slice %5 {offsets = [0, 96], sizes = [2, 32], strides = [1, 1]} : vector<2x128xf32> to vector<2x32xf32>
    %cst_10 = arith.constant dense<0.000000e+00> : vector<2xf32>
    %22 = vector.multi_reduction <add>, %21, %cst_10 [1] : vector<2x32xf32> to vector<2xf32>
    %23 = vector.shape_cast %22 : vector<2xf32> to vector<2x1xf32>
    %cst_11 = arith.constant -0.001953125 : f32
    %24 = vector.broadcast %cst_11 : f32 to vector<2x1xf32>
    %25 = arith.mulf %24, %23 : vector<2x1xf32>
    %26 = tpu.concatenate %10, %15, %20, %25 in 1 : vector<2x1xf32>, vector<2x1xf32>, vector<2x1xf32>, vector<2x1xf32> -> vector<2x4xf32>
    %c0_12 = arith.constant 0 : index
    %c0_13 = arith.constant 0 : index
    %27 = vector.load %arg3[%c0_12, %c0_13] : memref<4x12xf32, #tpu.memory_space<vmem>>, vector<4x12xf32>
    %cst_14 = arith.constant dense<0.000000e+00> : vector<2x12xf32>
    %28 = tpu.matmul %26, %27, %cst_14 {dimension_numbers = #tpu.dot_dimension_numbers<[1], [0], [0], [1], [0, 0, 1, 1], [], []>, precision = #tpu.contract_precision<fp32>} : vector<2x4xf32>, vector<4x12xf32>, vector<2x12xf32> -> vector<2x12xf32>
    %c0_15 = arith.constant 0 : index
    %c0_16 = arith.constant 0 : index
    %29 = vector.load %arg4[%c0_15, %c0_16] : memref<1x12xf32, #tpu.memory_space<vmem>>, vector<1x12xf32>
    %30 = vector.broadcast %29 : vector<1x12xf32> to vector<2x12xf32>
    %31 = arith.subf %28, %30 : vector<2x12xf32>
    %32 = arith.mulf %31, %31 : vector<2x12xf32>
    %33 = vector.extract_strided_slice %32 {offsets = [0, 0], sizes = [2, 4], strides = [1, 1]} : vector<2x12xf32> to vector<2x4xf32>
    %cst_17 = arith.constant dense<0.000000e+00> : vector<2xf32>
    %34 = vector.multi_reduction <add>, %33, %cst_17 [1] : vector<2x4xf32> to vector<2xf32>
    %35 = vector.shape_cast %34 : vector<2xf32> to vector<2x1xf32>
    %36 = vector.extract_strided_slice %32 {offsets = [0, 4], sizes = [2, 4], strides = [1, 1]} : vector<2x12xf32> to vector<2x4xf32>
    %cst_18 = arith.constant dense<0.000000e+00> : vector<2xf32>
    %37 = vector.multi_reduction <add>, %36, %cst_18 [1] : vector<2x4xf32> to vector<2xf32>
    %38 = vector.shape_cast %37 : vector<2xf32> to vector<2x1xf32>
    %39 = vector.extract_strided_slice %32 {offsets = [0, 8], sizes = [2, 4], strides = [1, 1]} : vector<2x12xf32> to vector<2x4xf32>
    %cst_19 = arith.constant dense<0.000000e+00> : vector<2xf32>
    %40 = vector.multi_reduction <add>, %39, %cst_19 [1] : vector<2x4xf32> to vector<2xf32>
    %41 = vector.shape_cast %40 : vector<2xf32> to vector<2x1xf32>
    %42 = tpu.concatenate %35, %38, %41 in 1 : vector<2x1xf32>, vector<2x1xf32>, vector<2x1xf32> -> vector<2x3xf32>
    %c0_20 = arith.constant 0 : index
    %c0_21 = arith.constant 0 : index
    %43 = vector.load %arg5[%c0_20, %c0_21] : memref<1x3xf32, #tpu.memory_space<vmem>>, vector<1x3xf32>
    %cst_22 = arith.constant 5.000000e-01 : f32
    %44 = vector.broadcast %cst_22 : f32 to vector<2x3xf32>
    %45 = arith.mulf %44, %42 : vector<2x3xf32>
    %46 = vector.broadcast %43 : vector<1x3xf32> to vector<2x3xf32>
    %47 = arith.subf %46, %45 : vector<2x3xf32>
    %cst_23 = arith.constant dense<0xFF800000> : vector<2xf32>
    %48 = vector.multi_reduction <maximumf>, %47, %cst_23 [1] : vector<2x3xf32> to vector<2xf32>
    %49 = vector.shape_cast %48 : vector<2xf32> to vector<2x1xf32>
    %50 = vector.broadcast %49 : vector<2x1xf32> to vector<2x3xf32>
    %51 = arith.subf %47, %50 : vector<2x3xf32>
    %52 = math.exp %51 : vector<2x3xf32>
    %cst_24 = arith.constant dense<0.000000e+00> : vector<2xf32>
    %53 = vector.multi_reduction <add>, %52, %cst_24 [1] : vector<2x3xf32> to vector<2xf32>
    %54 = vector.shape_cast %53 : vector<2xf32> to vector<2x1xf32>
    %55 = math.log %54 : vector<2x1xf32>
    %56 = arith.addf %49, %55 : vector<2x1xf32>
    %c0_25 = arith.constant 0 : index
    %c0_26 = arith.constant 0 : index
    %57 = vector.load %arg6[%c0_25, %c0_26] : memref<2x1xf32, #tpu.memory_space<vmem>>, vector<2x1xf32>
    tpu.vector_store %arg6[%c0_25, %c0_26], %56 {strides = array<i32>} : memref<2x1xf32, #tpu.memory_space<vmem>>, vector<2x1xf32>,
    return
  }
  func.func @transform_0(%arg0: i32) -> (i32, i32) {
    %c0_i32 = arith.constant 0 : i32
    %c0_i32_0 = arith.constant 0 : i32
    return %arg0, %c0_i32 : i32, i32
  }
  func.func @transform_1(%arg0: i32) -> (i32, i32) {
    %c0_i32 = arith.constant 0 : i32
    %c0_i32_0 = arith.constant 0 : i32
    %c0_i32_1 = arith.constant 0 : i32
    return %c0_i32, %c0_i32_0 : i32, i32
  }
  func.func @transform_2(%arg0: i32) -> (i32, i32) {
    %c0_i32 = arith.constant 0 : i32
    %c0_i32_0 = arith.constant 0 : i32
    %c0_i32_1 = arith.constant 0 : i32
    return %c0_i32, %c0_i32_0 : i32, i32
  }
  func.func @transform_3(%arg0: i32) -> (i32, i32) {
    %c0_i32 = arith.constant 0 : i32
    %c0_i32_0 = arith.constant 0 : i32
    %c0_i32_1 = arith.constant 0 : i32
    return %c0_i32, %c0_i32_0 : i32, i32
  }
  func.func @transform_4(%arg0: i32) -> (i32, i32) {
    %c0_i32 = arith.constant 0 : i32
    %c0_i32_0 = arith.constant 0 : i32
    %c0_i32_1 = arith.constant 0 : i32
    return %c0_i32, %c0_i32_0 : i32, i32
  }
  func.func @transform_5(%arg0: i32) -> (i32, i32) {
    %c0_i32 = arith.constant 0 : i32
    %c0_i32_0 = arith.constant 0 : i32
    return %arg0, %c0_i32 : i32, i32
  }
}

</mosaic_0001>

<llo_original>
// kernel: tpu_custom_call.1
$region0: #{tpu_custom_call.1}
  #allocation0 [shape = 'u32[]', space=smem, size = 0x4, offset = 0x4, fixed_abs, tag = 'smem constant byte address 0x4 - core index']
  #allocation1 [shape = 'u32[144,128]{1,0:T(1,128)}', space=vmem, size = 0x12000, scoped, tag = 'internal scratch']
  %s0 = inlined_call_operand.hbm [shape: f32[32,64], index: 0, kind: input, shape index: {}]
  %s1 = inlined_call_operand.hbm [shape: f32[64,128], index: 1, kind: input, shape index: {}]
  %s2 = inlined_call_operand.vmem [shape: f32[4,12], index: 2, kind: input, shape index: {}]
  %s3 = inlined_call_operand.vmem [shape: f32[1,12], index: 3, kind: input, shape index: {}]
  %s4 = inlined_call_operand.vmem [shape: f32[1,3], index: 4, kind: input, shape index: {}]
  %s5 = inlined_call_operand.vmem [shape: f32[2,1], index: 5, kind: output, shape index: {}]
  %s6 = sld [smem:[#allocation0]]
  $region38: #{tpu_custom_call.1} parent=0
    _
  %s8 = ssub.s32 1, %s6
  %s9 = scalar_select 0, %s8, %s6
  $region1: #{tpu_custom_call.1} parent=0
    #allocation2 [shape = 'u8[16384]{0}', space=vmem, size = 0x4000, scoped, tag = 'input window, operand 0, single buffered']
    #allocation3 [shape = 's32[1]{0}', space=sflag, size = 0x4, scoped, tag = 'scoped memory for tpu_custom_call.1']
    #allocation4 [shape = 'u8[32768]{0}', space=vmem, size = 0x8000, scoped, tag = 'input window, operand 1, single buffered']
    #allocation5 [shape = 's32[1]{0}', space=sflag, size = 0x4, scoped, tag = 'scoped memory for tpu_custom_call.1']
    %10 = vsyncpa [#allocation3], 0
    %11 = vsyncpa [#allocation5], 0
    // Predicated region
    $region2: #{tpu_custom_call.1} parent=1 // pred_check
      _
    $region3: #{tpu_custom_call.1} parent=1 // pred_check_branch
      %13 = sbr.rel (0) target = $region5
    $region4: #{tpu_custom_call.1} parent=1 // pred_region
      %s15 = ssub.s32 512, 512
      %16 = vsyncadd [#allocation3], %s15
      %s17 = sshll.u32 [#allocation2], 4
      %s18 = int_to_ptr.vmem [resolvable:$true] %s17
      %23 = dma.hbm_to_vmem [thread:$0]  %s0, 512, %s18, [#allocation3], 128, 128, 8
    $region5: #{tpu_custom_call.1} parent=1 // pred_fallthru
      _
    // Predicated region
    $region6: #{tpu_custom_call.1} parent=1 // pred_check
      _
    $region7: #{tpu_custom_call.1} parent=1 // pred_check_branch
      %25 = sbr.rel (0) target = $region9
    $region8: #{tpu_custom_call.1} parent=1 // pred_region
      %s27 = ssub.s32 1024, 1024
      %28 = vsyncadd [#allocation5], %s27
      %s29 = sshll.u32 [#allocation4], 4
      %s30 = int_to_ptr.vmem [resolvable:$true] %s29
      %35 = dma.hbm_to_vmem [thread:$0]  %s1, 1024, %s30, [#allocation5], 128, 128, 8
    $region9: #{tpu_custom_call.1} parent=1 // pred_fallthru
      _
    // Predicated region
    $region10: #{tpu_custom_call.1} parent=1 // pred_check
      _
    $region11: #{tpu_custom_call.1} parent=1 // pred_check_branch
      %37 = sbr.rel (0) target = $region13
    $region12: #{tpu_custom_call.1} parent=1 // pred_region
      _
    $region13: #{tpu_custom_call.1} parent=1 // pred_fallthru
      _
    // Predicated region
    $region14: #{tpu_custom_call.1} parent=1 // pred_check
      _
    $region15: #{tpu_custom_call.1} parent=1 // pred_check_branch
      %39 = sbr.rel (0) target = $region17
    $region16: #{tpu_custom_call.1} parent=1 // pred_region
      _
    $region17: #{tpu_custom_call.1} parent=1 // pred_fallthru
      _
    // Predicated region
    $region18: #{tpu_custom_call.1} parent=1 // pred_check
      _
    $region19: #{tpu_custom_call.1} parent=1 // pred_check_branch
      %41 = sbr.rel (0) target = $region21
    $region20: #{tpu_custom_call.1} parent=1 // pred_region
      _
    $region21: #{tpu_custom_call.1} parent=1 // pred_fallthru
      _
    // Predicated region
    $region22: #{tpu_custom_call.1} parent=1 // pred_check
      _
    $region23: #{tpu_custom_call.1} parent=1 // pred_check_branch
      %43 = sbr.rel (0) target = $region25
    $region24: #{tpu_custom_call.1} parent=1 // pred_region
      %44 = dma.done [#allocation3], 512
    $region25: #{tpu_custom_call.1} parent=1 // pred_fallthru
      _
    // Predicated region
    $region26: #{tpu_custom_call.1} parent=1 // pred_check
      _
    $region27: #{tpu_custom_call.1} parent=1 // pred_check_branch
      %46 = sbr.rel (0) target = $region29
    $region28: #{tpu_custom_call.1} parent=1 // pred_region
      %47 = dma.done [#allocation5], 1024
    $region29: #{tpu_custom_call.1} parent=1 // pred_fallthru
      _
    %v48 = vld [vmem:[#allocation2] sm:$0xff]
    %v49 = vld [vmem:[#allocation2 + $0x8] sm:$0xff]
    %v50 = vld [vmem:[#allocation2 + $0x10] sm:$0xff]
    %v51 = vld [vmem:[#allocation2 + $0x18] sm:$0xff]
    %v52 = vld [vmem:[#allocation4] sm:$0xff]
    %v53 = vld [vmem:[#allocation4 + $0x8] sm:$0xff]
    %v54 = vld [vmem:[#allocation4 + $0x10] sm:$0xff]
    %v55 = vld [vmem:[#allocation4 + $0x18] sm:$0xff]
    %v56 = vld [vmem:[#allocation4 + $0x20] sm:$0xff]
    %v57 = vld [vmem:[#allocation4 + $0x28] sm:$0xff]
    %v58 = vld [vmem:[#allocation4 + $0x30] sm:$0xff]
    %v59 = vld [vmem:[#allocation4 + $0x38] sm:$0xff]
    %vm60 = vcmask 523264
    %v62 = vsel %vm60, %v48, 0
    %v65 = vsel %vm60, %v49, 0
    %v68 = vsel %vm60, %v50, 0
    %v71 = vsel %vm60, %v51, 0
    %73 = vmatprep.subr.mxu0 0.0
    %v74 = vand.u32 %v52, 4294901760
    %75 = vmatpush1.msra.mxu0 %v74
    %76 = vmatprep.subr.mxu0 0.0
    %v77 = vand.u32 %v53, 4294901760
    %78 = vmatpush1.msra.mxu0 %v77
    %79 = vmatprep.subr.mxu0 0.0
    %v80 = vand.u32 %v54, 4294901760
    %81 = vmatpush1.msra.mxu0 %v80
    %82 = vmatprep.subr.mxu0 0.0
    %v83 = vand.u32 %v55, 4294901760
    %84 = vmatpush1.msra.mxu0 %v83
    %85 = vmatprep.subr.mxu0 0.0
    %v86 = vand.u32 %v56, 4294901760
    %87 = vmatpush1.msra.mxu0 %v86
    %88 = vmatprep.subr.mxu0 0.0
    %v89 = vand.u32 %v57, 4294901760
    %90 = vmatpush1.msra.mxu0 %v89
    %91 = vmatprep.subr.mxu0 0.0
    %v92 = vand.u32 %v58, 4294901760
    %93 = vmatpush1.msra.mxu0 %v92
    %94 = vmatprep.subr.mxu0 0.0
    %v95 = vand.u32 %v59, 4294901760
    %96 = vmatpush1.msra.mxu0 %v95
    %97 = vmatprep.subr.mxu0 0.0
    %98 = vmatpush1.msra.mxu0 0.0
    %99 = vmatprep.subr.mxu0 0.0
    %100 = vmatpush1.msra.mxu0 0.0
    %101 = vmatprep.subr.mxu0 0.0
    %102 = vmatpush1.msra.mxu0 0.0
    %103 = vmatprep.subr.mxu0 0.0
    %104 = vmatpush1.msra.mxu0 0.0
    %105 = vmatprep.subr.mxu0 0.0
    %106 = vmatpush1.msra.mxu0 0.0
    %107 = vmatprep.subr.mxu0 0.0
    %108 = vmatpush1.msra.mxu0 0.0
    %109 = vmatprep.subr.mxu0 0.0
    %110 = vmatpush1.msra.mxu0 0.0
    %111 = vmatprep.subr.mxu0 0.0
    %112 = vmatpush1.msra.mxu0 0.0
    %113 = vmatprep.subr.mxu0 0.0
    %114 = vmatpush1.msra.mxu0 0.0
    %115 = vmatprep.subr.mxu0 0.0
    %116 = vmatpush1.msra.mxu0 0.0
    %117 = vmatprep.subr.mxu0 0.0
    %118 = vmatpush1.msra.mxu0 0.0
    %119 = vmatprep.subr.mxu0 0.0
    %120 = vmatpush1.msra.mxu0 0.0
    %121 = vmatprep.subr.mxu0 0.0
    %122 = vmatpush1.msra.mxu0 0.0
    %123 = vmatprep.subr.mxu0 0.0
    %124 = vmatpush1.msra.mxu0 0.0
    %125 = vmatprep.subr.mxu0 0.0
    %126 = vmatpush1.msra.mxu0 0.0
    %127 = vmatprep.subr.mxu0 0.0
    %128 = vmatpush1.msra.mxu0 0.0
    %129 = vmatprep.subr.mxu0 0.0
    %130 = vmatpush1.msra.mxu0 0.0
    %131 = vmatprep.subr.mxu0 0.0
    %132 = vmatpush1.msra.mxu0 0.0
    %133 = vmatprep.subr.mxu0 0.0
    %134 = vmatpush1.msra.mxu0 0.0
    %135 = vmatprep.subr.mxu0 0.0
    %136 = vmatpush1.msra.mxu0 0.0
    %137 = vmatprep.subr.mxu0 0.0
    %138 = vmatpush1.msra.mxu0 0.0
    %139 = vmatprep.subr.mxu0 0.0
    %140 = vmatpush1.msra.mxu0 0.0
    %141 = vmatprep.subr.mxu0 0.0
    %142 = vmatpush1.msra.mxu0 0.0
    %143 = vmatprep.subr.mxu0 0.0
    %144 = vmatpush1.msra.mxu0 0.0
    %145 = vmatprep.mubr.f32.mxu0 0.0
    %v146 = vand.u32 %v62, 4294901760
    %v147 = vsub.f32 %v62, %v146
    %v148 = vand.u32 %v147, 4294901760
    %v149 = vsub.f32 %v147, %v148
    %v150 = vand.u32 %v149, 4294901760
    %151 = vmatmul.mubr.f32.gmra.mrb[0].mxu0 %v150
    %v152 = vpop.f32.mrb[0].mxu0
    %v153 = vadd.f32 0.0, %v152
    %v154 = vpop.f32.mrb[0].mxu0
    %155 = vmatprep.mubr.f32.mxu0 0.0
    %v156 = vand.u32 %v65, 4294901760
    %v157 = vsub.f32 %v65, %v156
    %v158 = vand.u32 %v157, 4294901760
    %v159 = vsub.f32 %v157, %v158
    %v160 = vand.u32 %v159, 4294901760
    %161 = vmatmul.mubr.f32.gmra.mrb[0].mxu0 %v160
    %v162 = vpop.f32.mrb[0].mxu0
    %v163 = vadd.f32 0.0, %v162
    %v164 = vpop.f32.mrb[0].mxu0
    %165 = vmatprep.mubr.f32.mxu0 0.0
    %v166 = vand.u32 %v68, 4294901760
    %v167 = vsub.f32 %v68, %v166
    %v168 = vand.u32 %v167, 4294901760
    %v169 = vsub.f32 %v167, %v168
    %v170 = vand.u32 %v169, 4294901760
    %171 = vmatmul.mubr.f32.gmra.mrb[0].mxu0 %v170
    %v172 = vpop.f32.mrb[0].mxu0
    %v173 = vadd.f32 0.0, %v172
    %v174 = vpop.f32.mrb[0].mxu0
    %175 = vmatprep.mubr.f32.mxu0 0.0
    %v176 = vand.u32 %v71, 4294901760
    %v177 = vsub.f32 %v71, %v176
    %v178 = vand.u32 %v177, 4294901760
    %v179 = vsub.f32 %v177, %v178
    %v180 = vand.u32 %v179, 4294901760
    %181 = vmatmul.mubr.f32.gmra.mrb[0].mxu0 %v180
    %v182 = vpop.f32.mrb[0].mxu0
    %v183 = vadd.f32 0.0, %v182
    %v184 = vpop.f32.mrb[0].mxu0
    %185 = vdwg.mxu0
    %186 = vmatprep.subr.mxu0 0.0
    %v187 = vand.u32 %v52, 4294901760
    %v188 = vsub.f32 %v52, %v187
    %v189 = vand.u32 %v188, 4294901760
    %v190 = vsub.f32 %v188, %v189
    %v191 = vand.u32 %v190, 4294901760
    %192 = vmatpush1.msra.mxu0 %v191
    %193 = vmatprep.subr.mxu0 0.0
    %v194 = vand.u32 %v53, 4294901760
    %v195 = vsub.f32 %v53, %v194
    %v196 = vand.u32 %v195, 4294901760
    %v197 = vsub.f32 %v195, %v196
    %v198 = vand.u32 %v197, 4294901760
    %199 = vmatpush1.msra.mxu0 %v198
    %200 = vmatprep.subr.mxu0 0.0
    %v201 = vand.u32 %v54, 4294901760
    %v202 = vsub.f32 %v54, %v201
    %v203 = vand.u32 %v202, 4294901760
    %v204 = vsub.f32 %v202, %v203
    %v205 = vand.u32 %v204, 4294901760
    %206 = vmatpush1.msra.mxu0 %v205
    %207 = vmatprep.subr.mxu0 0.0
    %v208 = vand.u32 %v55, 4294901760
    %v209 = vsub.f32 %v55, %v208
    %v210 = vand.u32 %v209, 4294901760
    %v211 = vsub.f32 %v209, %v210
    %v212 = vand.u32 %v211, 4294901760
    %213 = vmatpush1.msra.mxu0 %v212
    %214 = vmatprep.subr.mxu0 0.0
    %v215 = vand.u32 %v56, 4294901760
    %v216 = vsub.f32 %v56, %v215
    %v217 = vand.u32 %v216, 4294901760
    %v218 = vsub.f32 %v216, %v217
    %v219 = vand.u32 %v218, 4294901760
    %220 = vmatpush1.msra.mxu0 %v219
    %221 = vmatprep.subr.mxu0 0.0
    %v222 = vand.u32 %v57, 4294901760
    %v223 = vsub.f32 %v57, %v222
    %v224 = vand.u32 %v223, 4294901760
    %v225 = vsub.f32 %v223, %v224
    %v226 = vand.u32 %v225, 4294901760
    %227 = vmatpush1.msra.mxu0 %v226
    %228 = vmatprep.subr.mxu0 0.0
    %v229 = vand.u32 %v58, 4294901760
    %v230 = vsub.f32 %v58, %v229
    %v231 = vand.u32 %v230, 4294901760
    %v232 = vsub.f32 %v230, %v231
    %v233 = vand.u32 %v232, 4294901760
    %234 = vmatpush1.msra.mxu0 %v233
    %235 = vmatprep.subr.mxu0 0.0
    %v236 = vand.u32 %v59, 4294901760
    %v237 = vsub.f32 %v59, %v236
    %v238 = vand.u32 %v237, 4294901760
    %v239 = vsub.f32 %v237, %v238
    %v240 = vand.u32 %v239, 4294901760
    %241 = vmatpush1.msra.mxu0 %v240
    %242 = vmatprep.subr.mxu0 0.0
    %243 = vmatpush1.msra.mxu0 0.0
    %244 = vmatprep.subr.mxu0 0.0
    %245 = vmatpush1.msra.mxu0 0.0
    %246 = vmatprep.subr.mxu0 0.0
    %247 = vmatpush1.msra.mxu0 0.0
    %248 = vmatprep.subr.mxu0 0.0
    %249 = vmatpush1.msra.mxu0 0.0
    %250 = vmatprep.subr.mxu0 0.0
    %251 = vmatpush1.msra.mxu0 0.0
    %252 = vmatprep.subr.mxu0 0.0
    %253 = vmatpush1.msra.mxu0 0.0
    %254 = vmatprep.subr.mxu0 0.0
    %255 = vmatpush1.msra.mxu0 0.0
    %256 = vmatprep.subr.mxu0 0.0
    %257 = vmatpush1.msra.mxu0 0.0
    %258 = vmatprep.subr.mxu0 0.0
    %259 = vmatpush1.msra.mxu0 0.0
    %260 = vmatprep.subr.mxu0 0.0
    %261 = vmatpush1.msra.mxu0 0.0
    %262 = vmatprep.subr.mxu0 0.0
    %263 = vmatpush1.msra.mxu0 0.0
    %264 = vmatprep.subr.mxu0 0.0
    %265 = vmatpush1.msra.mxu0 0.0
    %266 = vmatprep.subr.mxu0 0.0
    %267 = vmatpush1.msra.mxu0 0.0
    %268 = vmatprep.subr.mxu0 0.0
    %269 = vmatpush1.msra.mxu0 0.0
    %270 = vmatprep.subr.mxu0 0.0
    %271 = vmatpush1.msra.mxu0 0.0
    %272 = vmatprep.subr.mxu0 0.0
    %273 = vmatpush1.msra.mxu0 0.0
    %274 = vmatprep.subr.mxu0 0.0
    %275 = vmatpush1.msra.mxu0 0.0
    %276 = vmatprep.subr.mxu0 0.0
    %277 = vmatpush1.msra.mxu0 0.0
    %278 = vmatprep.subr.mxu0 0.0
    %279 = vmatpush1.msra.mxu0 0.0
    %280 = vmatprep.subr.mxu0 0.0
    %281 = vmatpush1.msra.mxu0 0.0
    %282 = vmatprep.subr.mxu0 0.0
    %283 = vmatpush1.msra.mxu0 0.0
    %284 = vmatprep.subr.mxu0 0.0
    %285 = vmatpush1.msra.mxu0 0.0
    %286 = vmatprep.subr.mxu0 0.0
    %287 = vmatpush1.msra.mxu0 0.0
    %288 = vmatprep.subr.mxu0 0.0
    %289 = vmatpush1.msra.mxu0 0.0
    %290 = vmatprep.mubr.f32.mxu0 0.0
    %v291 = vand.u32 %v62, 4294901760
    %292 = vmatmul.mubr.f32.gmra.mrb[0].mxu0 %v291
    %v293 = vpop.f32.mrb[0].mxu0
    %v294 = vadd.f32 %v153, %v293
    %v295 = vpop.f32.mrb[0].mxu0
    %296 = vmatprep.mubr.f32.mxu0 0.0
    %v297 = vand.u32 %v65, 4294901760
    %298 = vmatmul.mubr.f32.gmra.mrb[0].mxu0 %v297
    %v299 = vpop.f32.mrb[0].mxu0
    %v300 = vadd.f32 %v163, %v299
    %v301 = vpop.f32.mrb[0].mxu0
    %302 = vmatprep.mubr.f32.mxu0 0.0
    %v303 = vand.u32 %v68, 4294901760
    %304 = vmatmul.mubr.f32.gmra.mrb[0].mxu0 %v303
    %v305 = vpop.f32.mrb[0].mxu0
    %v306 = vadd.f32 %v173, %v305
    %v307 = vpop.f32.mrb[0].mxu0
    %308 = vmatprep.mubr.f32.mxu0 0.0
    %v309 = vand.u32 %v71, 4294901760
    %310 = vmatmul.mubr.f32.gmra.mrb[0].mxu0 %v309
    %v311 = vpop.f32.mrb[0].mxu0
    %v312 = vadd.f32 %v183, %v311
    %v313 = vpop.f32.mrb[0].mxu0
    %314 = vdwg.mxu0
    %315 = vmatprep.subr.mxu0 0.0
    %v316 = vand.u32 %v52, 4294901760
    %v317 = vsub.f32 %v52, %v316
    %318 = vmatpush1.msra.mxu0 %v317
    %319 = vmatprep.subr.mxu0 0.0
    %v320 = vand.u32 %v53, 4294901760
    %v321 = vsub.f32 %v53, %v320
    %322 = vmatpush1.msra.mxu0 %v321
    %323 = vmatprep.subr.mxu0 0.0
    %v324 = vand.u32 %v54, 4294901760
    %v325 = vsub.f32 %v54, %v324
    %326 = vmatpush1.msra.mxu0 %v325
    %327 = vmatprep.subr.mxu0 0.0
    %v328 = vand.u32 %v55, 4294901760
    %v329 = vsub.f32 %v55, %v328
    %330 = vmatpush1.msra.mxu0 %v329
    %331 = vmatprep.subr.mxu0 0.0
    %v332 = vand.u32 %v56, 4294901760
    %v333 = vsub.f32 %v56, %v332
    %334 = vmatpush1.msra.mxu0 %v333
    %335 = vmatprep.subr.mxu0 0.0
    %v336 = vand.u32 %v57, 4294901760
    %v337 = vsub.f32 %v57, %v336
    %338 = vmatpush1.msra.mxu0 %v337
    %339 = vmatprep.subr.mxu0 0.0
    %v340 = vand.u32 %v58, 4294901760
    %v341 = vsub.f32 %v58, %v340
    %342 = vmatpush1.msra.mxu0 %v341
    %343 = vmatprep.subr.mxu0 0.0
    %v344 = vand.u32 %v59, 4294901760
    %v345 = vsub.f32 %v59, %v344
    %346 = vmatpush1.msra.mxu0 %v345
    %347 = vmatprep.subr.mxu0 0.0
    %348 = vmatpush1.msra.mxu0 0.0
    %349 = vmatprep.subr.mxu0 0.0
    %350 = vmatpush1.msra.mxu0 0.0
    %351 = vmatprep.subr.mxu0 0.0
    %352 = vmatpush1.msra.mxu0 0.0
    %353 = vmatprep.subr.mxu0 0.0
    %354 = vmatpush1.msra.mxu0 0.0
    %355 = vmatprep.subr.mxu0 0.0
    %356 = vmatpush1.msra.mxu0 0.0
    %357 = vmatprep.subr.mxu0 0.0
    %358 = vmatpush1.msra.mxu0 0.0
    %359 = vmatprep.subr.mxu0 0.0
    %360 = vmatpush1.msra.mxu0 0.0
    %361 = vmatprep.subr.mxu0 0.0
    %362 = vmatpush1.msra.mxu0 0.0
    %363 = vmatprep.subr.mxu0 0.0
    %364 = vmatpush1.msra.mxu0 0.0
    %365 = vmatprep.subr.mxu0 0.0
    %366 = vmatpush1.msra.mxu0 0.0
    %367 = vmatprep.subr.mxu0 0.0
    %368 = vmatpush1.msra.mxu0 0.0
    %369 = vmatprep.subr.mxu0 0.0
    %370 = vmatpush1.msra.mxu0 0.0
    %371 = vmatprep.subr.mxu0 0.0
    %372 = vmatpush1.msra.mxu0 0.0
    %373 = vmatprep.subr.mxu0 0.0
    %374 = vmatpush1.msra.mxu0 0.0
    %375 = vmatprep.subr.mxu0 0.0
    %376 = vmatpush1.msra.mxu0 0.0
    %377 = vmatprep.subr.mxu0 0.0
    %378 = vmatpush1.msra.mxu0 0.0
    %379 = vmatprep.subr.mxu0 0.0
    %380 = vmatpush1.msra.mxu0 0.0
    %381 = vmatprep.subr.mxu0 0.0
    %382 = vmatpush1.msra.mxu0 0.0
    %383 = vmatprep.subr.mxu0 0.0
    %384 = vmatpush1.msra.mxu0 0.0
    %385 = vmatprep.subr.mxu0 0.0
    %386 = vmatpush1.msra.mxu0 0.0
    %387 = vmatprep.subr.mxu0 0.0
    %388 = vmatpush1.msra.mxu0 0.0
    %389 = vmatprep.subr.mxu0 0.0
    %390 = vmatpush1.msra.mxu0 0.0
    %391 = vmatprep.subr.mxu0 0.0
    %392 = vmatpush1.msra.mxu0 0.0
    %393 = vmatprep.subr.mxu0 0.0
    %394 = vmatpush1.msra.mxu0 0.0
    %395 = vmatprep.mubr.f32.mxu0 0.0
    %v396 = vand.u32 %v62, 4294901760
    %v397 = vsub.f32 %v62, %v396
    %398 = vmatmul.mubr.f32.gmra.mrb[0].mxu0 %v397
    %v399 = vpop.f32.mrb[0].mxu0
    %v400 = vadd.f32 %v294, %v399
    %v401 = vpop.f32.mrb[0].mxu0
    %402 = vmatprep.mubr.f32.mxu0 0.0
    %v403 = vand.u32 %v65, 4294901760
    %v404 = vsub.f32 %v65, %v403
    %405 = vmatmul.mubr.f32.gmra.mrb[0].mxu0 %v404
    %v406 = vpop.f32.mrb[0].mxu0
    %v407 = vadd.f32 %v300, %v406
    %v408 = vpop.f32.mrb[0].mxu0
    %409 = vmatprep.mubr.f32.mxu0 0.0
    %v410 = vand.u32 %v68, 4294901760
    %v411 = vsub.f32 %v68, %v410
    %412 = vmatmul.mubr.f32.gmra.mrb[0].mxu0 %v411
    %v413 = vpop.f32.mrb[0].mxu0
    %v414 = vadd.f32 %v306, %v413
    %v415 = vpop.f32.mrb[0].mxu0
    %416 = vmatprep.mubr.f32.mxu0 0.0
    %v417 = vand.u32 %v71, 4294901760
    %v418 = vsub.f32 %v71, %v417
    %419 = vmatmul.mubr.f32.gmra.mrb[0].mxu0 %v418
    %v420 = vpop.f32.mrb[0].mxu0
    %v421 = vadd.f32 %v312, %v420
    %v422 = vpop.f32.mrb[0].mxu0
    %423 = vdwg.mxu0
    %424 = vmatprep.subr.mxu0 0.0
    %v425 = vand.u32 %v52, 4294901760
    %426 = vmatpush1.msra.mxu0 %v425
    %427 = vmatprep.subr.mxu0 0.0
    %v428 = vand.u32 %v53, 4294901760
    %429 = vmatpush1.msra.mxu0 %v428
    %430 = vmatprep.subr.mxu0 0.0
    %v431 = vand.u32 %v54, 4294901760
    %432 = vmatpush1.msra.mxu0 %v431
    %433 = vmatprep.subr.mxu0 0.0
    %v434 = vand.u32 %v55, 4294901760
    %435 = vmatpush1.msra.mxu0 %v434
    %436 = vmatprep.subr.mxu0 0.0
    %v437 = vand.u32 %v56, 4294901760
    %438 = vmatpush1.msra.mxu0 %v437
    %439 = vmatprep.subr.mxu0 0.0
    %v440 = vand.u32 %v57, 4294901760
    %441 = vmatpush1.msra.mxu0 %v440
    %442 = vmatprep.subr.mxu0 0.0
    %v443 = vand.u32 %v58, 4294901760
    %444 = vmatpush1.msra.mxu0 %v443
    %445 = vmatprep.subr.mxu0 0.0
    %v446 = vand.u32 %v59, 4294901760
    %447 = vmatpush1.msra.mxu0 %v446
    %448 = vmatprep.subr.mxu0 0.0
    %449 = vmatpush1.msra.mxu0 0.0
    %450 = vmatprep.subr.mxu0 0.0
    %451 = vmatpush1.msra.mxu0 0.0
    %452 = vmatprep.subr.mxu0 0.0
    %453 = vmatpush1.msra.mxu0 0.0
    %454 = vmatprep.subr.mxu0 0.0
    %455 = vmatpush1.msra.mxu0 0.0
    %456 = vmatprep.subr.mxu0 0.0
    %457 = vmatpush1.msra.mxu0 0.0
    %458 = vmatprep.subr.mxu0 0.0
    %459 = vmatpush1.msra.mxu0 0.0
    %460 = vmatprep.subr.mxu0 0.0
    %461 = vmatpush1.msra.mxu0 0.0
    %462 = vmatprep.subr.mxu0 0.0
    %463 = vmatpush1.msra.mxu0 0.0
    %464 = vmatprep.subr.mxu0 0.0
    %465 = vmatpush1.msra.mxu0 0.0
    %466 = vmatprep.subr.mxu0 0.0
    %467 = vmatpush1.msra.mxu0 0.0
    %468 = vmatprep.subr.mxu0 0.0
    %469 = vmatpush1.msra.mxu0 0.0
    %470 = vmatprep.subr.mxu0 0.0
    %471 = vmatpush1.msra.mxu0 0.0
    %472 = vmatprep.subr.mxu0 0.0
    %473 = vmatpush1.msra.mxu0 0.0
    %474 = vmatprep.subr.mxu0 0.0
    %475 = vmatpush1.msra.mxu0 0.0
    %476 = vmatprep.subr.mxu0 0.0
    %477 = vmatpush1.msra.mxu0 0.0
    %478 = vmatprep.subr.mxu0 0.0
    %479 = vmatpush1.msra.mxu0 0.0
    %480 = vmatprep.subr.mxu0 0.0
    %481 = vmatpush1.msra.mxu0 0.0
    %482 = vmatprep.subr.mxu0 0.0
    %483 = vmatpush1.msra.mxu0 0.0
    %484 = vmatprep.subr.mxu0 0.0
    %485 = vmatpush1.msra.mxu0 0.0
    %486 = vmatprep.subr.mxu0 0.0
    %487 = vmatpush1.msra.mxu0 0.0
    %488 = vmatprep.subr.mxu0 0.0
    %489 = vmatpush1.msra.mxu0 0.0
    %490 = vmatprep.subr.mxu0 0.0
    %491 = vmatpush1.msra.mxu0 0.0
    %492 = vmatprep.subr.mxu0 0.0
    %493 = vmatpush1.msra.mxu0 0.0
    %494 = vmatprep.subr.mxu0 0.0
    %495 = vmatpush1.msra.mxu0 0.0
    %496 = vmatprep.mubr.f32.mxu0 0.0
    %v497 = vand.u32 %v62, 4294901760
    %v498 = vsub.f32 %v62, %v497
    %v499 = vand.u32 %v498, 4294901760
    %500 = vmatmul.mubr.f32.gmra.mrb[0].mxu0 %v499
    %v501 = vpop.f32.mrb[0].mxu0
    %v502 = vadd.f32 %v400, %v501
    %v503 = vpop.f32.mrb[0].mxu0
    %504 = vmatprep.mubr.f32.mxu0 0.0
    %v505 = vand.u32 %v65, 4294901760
    %v506 = vsub.f32 %v65, %v505
    %v507 = vand.u32 %v506, 4294901760
    %508 = vmatmul.mubr.f32.gmra.mrb[0].mxu0 %v507
    %v509 = vpop.f32.mrb[0].mxu0
    %v510 = vadd.f32 %v407, %v509
    %v511 = vpop.f32.mrb[0].mxu0
    %512 = vmatprep.mubr.f32.mxu0 0.0
    %v513 = vand.u32 %v68, 4294901760
    %v514 = vsub.f32 %v68, %v513
    %v515 = vand.u32 %v514, 4294901760
    %516 = vmatmul.mubr.f32.gmra.mrb[0].mxu0 %v515
    %v517 = vpop.f32.mrb[0].mxu0
    %v518 = vadd.f32 %v414, %v517
    %v519 = vpop.f32.mrb[0].mxu0
    %520 = vmatprep.mubr.f32.mxu0 0.0
    %v521 = vand.u32 %v71, 4294901760
    %v522 = vsub.f32 %v71, %v521
    %v523 = vand.u32 %v522, 4294901760
    %524 = vmatmul.mubr.f32.gmra.mrb[0].mxu0 %v523
    %v525 = vpop.f32.mrb[0].mxu0
    %v526 = vadd.f32 %v421, %v525
    %v527 = vpop.f32.mrb[0].mxu0
    %528 = vdwg.mxu0
    %529 = vmatprep.subr.mxu0 0.0
    %v530 = vand.u32 %v52, 4294901760
    %v531 = vsub.f32 %v52, %v530
    %v532 = vand.u32 %v531, 4294901760
    %533 = vmatpush1.msra.mxu0 %v532
    %534 = vmatprep.subr.mxu0 0.0
    %v535 = vand.u32 %v53, 4294901760
    %v536 = vsub.f32 %v53, %v535
    %v537 = vand.u32 %v536, 4294901760
    %538 = vmatpush1.msra.mxu0 %v537
    %539 = vmatprep.subr.mxu0 0.0
    %v540 = vand.u32 %v54, 4294901760
    %v541 = vsub.f32 %v54, %v540
    %v542 = vand.u32 %v541, 4294901760
    %543 = vmatpush1.msra.mxu0 %v542
    %544 = vmatprep.subr.mxu0 0.0
    %v545 = vand.u32 %v55, 4294901760
    %v546 = vsub.f32 %v55, %v545
    %v547 = vand.u32 %v546, 4294901760
    %548 = vmatpush1.msra.mxu0 %v547
    %549 = vmatprep.subr.mxu0 0.0
    %v550 = vand.u32 %v56, 4294901760
    %v551 = vsub.f32 %v56, %v550
    %v552 = vand.u32 %v551, 4294901760
    %553 = vmatpush1.msra.mxu0 %v552
    %554 = vmatprep.subr.mxu0 0.0
    %v555 = vand.u32 %v57, 4294901760
    %v556 = vsub.f32 %v57, %v555
    %v557 = vand.u32 %v556, 4294901760
    %558 = vmatpush1.msra.mxu0 %v557
    %559 = vmatprep.subr.mxu0 0.0
    %v560 = vand.u32 %v58, 4294901760
    %v561 = vsub.f32 %v58, %v560
    %v562 = vand.u32 %v561, 4294901760
    %563 = vmatpush1.msra.mxu0 %v562
    %564 = vmatprep.subr.mxu0 0.0
    %v565 = vand.u32 %v59, 4294901760
    %v566 = vsub.f32 %v59, %v565
    %v567 = vand.u32 %v566, 4294901760
    %568 = vmatpush1.msra.mxu0 %v567
    %569 = vmatprep.subr.mxu0 0.0
    %570 = vmatpush1.msra.mxu0 0.0
    %571 = vmatprep.subr.mxu0 0.0
    %572 = vmatpush1.msra.mxu0 0.0
    %573 = vmatprep.subr.mxu0 0.0
    %574 = vmatpush1.msra.mxu0 0.0
    %575 = vmatprep.subr.mxu0 0.0
    %576 = vmatpush1.msra.mxu0 0.0
    %577 = vmatprep.subr.mxu0 0.0
    %578 = vmatpush1.msra.mxu0 0.0
    %579 = vmatprep.subr.mxu0 0.0
    %580 = vmatpush1.msra.mxu0 0.0
    %581 = vmatprep.subr.mxu0 0.0
    %582 = vmatpush1.msra.mxu0 0.0
    %583 = vmatprep.subr.mxu0 0.0
    %584 = vmatpush1.msra.mxu0 0.0
    %585 = vmatprep.subr.mxu0 0.0
    %586 = vmatpush1.msra.mxu0 0.0
    %587 = vmatprep.subr.mxu0 0.0
    %588 = vmatpush1.msra.mxu0 0.0
    %589 = vmatprep.subr.mxu0 0.0
    %590 = vmatpush1.msra.mxu0 0.0
    %591 = vmatprep.subr.mxu0 0.0
    %592 = vmatpush1.msra.mxu0 0.0
    %593 = vmatprep.subr.mxu0 0.0
    %594 = vmatpush1.msra.mxu0 0.0
    %595 = vmatprep.subr.mxu0 0.0
    %596 = vmatpush1.msra.mxu0 0.0
    %597 = vmatprep.subr.mxu0 0.0
    %598 = vmatpush1.msra.mxu0 0.0
    %599 = vmatprep.subr.mxu0 0.0
    %600 = vmatpush1.msra.mxu0 0.0
    %601 = vmatprep.subr.mxu0 0.0
    %602 = vmatpush1.msra.mxu0 0.0
    %603 = vmatprep.subr.mxu0 0.0
    %604 = vmatpush1.msra.mxu0 0.0
    %605 = vmatprep.subr.mxu0 0.0
    %606 = vmatpush1.msra.mxu0 0.0
    %607 = vmatprep.subr.mxu0 0.0
    %608 = vmatpush1.msra.mxu0 0.0
    %609 = vmatprep.subr.mxu0 0.0
    %610 = vmatpush1.msra.mxu0 0.0
    %611 = vmatprep.subr.mxu0 0.0
    %612 = vmatpush1.msra.mxu0 0.0
    %613 = vmatprep.subr.mxu0 0.0
    %614 = vmatpush1.msra.mxu0 0.0
    %615 = vmatprep.subr.mxu0 0.0
    %616 = vmatpush1.msra.mxu0 0.0
    %617 = vmatprep.mubr.f32.mxu0 0.0
    %v618 = vand.u32 %v62, 4294901760
    %619 = vmatmul.mubr.f32.gmra.mrb[0].mxu0 %v618
    %v620 = vpop.f32.mrb[0].mxu0
    %v621 = vadd.f32 %v502, %v620
    %v622 = vpop.f32.mrb[0].mxu0
    %623 = vmatprep.mubr.f32.mxu0 0.0
    %v624 = vand.u32 %v65, 4294901760
    %625 = vmatmul.mubr.f32.gmra.mrb[0].mxu0 %v624
    %v626 = vpop.f32.mrb[0].mxu0
    %v627 = vadd.f32 %v510, %v626
    %v628 = vpop.f32.mrb[0].mxu0
    %629 = vmatprep.mubr.f32.mxu0 0.0
    %v630 = vand.u32 %v68, 4294901760
    %631 = vmatmul.mubr.f32.gmra.mrb[0].mxu0 %v630
    %v632 = vpop.f32.mrb[0].mxu0
    %v633 = vadd.f32 %v518, %v632
    %v634 = vpop.f32.mrb[0].mxu0
    %635 = vmatprep.mubr.f32.mxu0 0.0
    %v636 = vand.u32 %v71, 4294901760
    %637 = vmatmul.mubr.f32.gmra.mrb[0].mxu0 %v636
    %v638 = vpop.f32.mrb[0].mxu0
    %v639 = vadd.f32 %v526, %v638
    %v640 = vpop.f32.mrb[0].mxu0
    %641 = vdwg.mxu0
    %642 = vmatprep.subr.mxu0 0.0
    %v643 = vand.u32 %v52, 4294901760
    %644 = vmatpush1.msra.mxu0 %v643
    %645 = vmatprep.subr.mxu0 0.0
    %v646 = vand.u32 %v53, 4294901760
    %647 = vmatpush1.msra.mxu0 %v646
    %648 = vmatprep.subr.mxu0 0.0
    %v649 = vand.u32 %v54, 4294901760
    %650 = vmatpush1.msra.mxu0 %v649
    %651 = vmatprep.subr.mxu0 0.0
    %v652 = vand.u32 %v55, 4294901760
    %653 = vmatpush1.msra.mxu0 %v652
    %654 = vmatprep.subr.mxu0 0.0
    %v655 = vand.u32 %v56, 4294901760
    %656 = vmatpush1.msra.mxu0 %v655
    %657 = vmatprep.subr.mxu0 0.0
    %v658 = vand.u32 %v57, 4294901760
    %659 = vmatpush1.msra.mxu0 %v658
    %660 = vmatprep.subr.mxu0 0.0
    %v661 = vand.u32 %v58, 4294901760
    %662 = vmatpush1.msra.mxu0 %v661
    %663 = vmatprep.subr.mxu0 0.0
    %v664 = vand.u32 %v59, 4294901760
    %665 = vmatpush1.msra.mxu0 %v664
    %666 = vmatprep.subr.mxu0 0.0
    %667 = vmatpush1.msra.mxu0 0.0
    %668 = vmatprep.subr.mxu0 0.0
    %669 = vmatpush1.msra.mxu0 0.0
    %670 = vmatprep.subr.mxu0 0.0
    %671 = vmatpush1.msra.mxu0 0.0
    %672 = vmatprep.subr.mxu0 0.0
    %673 = vmatpush1.msra.mxu0 0.0
    %674 = vmatprep.subr.mxu0 0.0
    %675 = vmatpush1.msra.mxu0 0.0
    %676 = vmatprep.subr.mxu0 0.0
    %677 = vmatpush1.msra.mxu0 0.0
    %678 = vmatprep.subr.mxu0 0.0
    %679 = vmatpush1.msra.mxu0 0.0
    %680 = vmatprep.subr.mxu0 0.0
    %681 = vmatpush1.msra.mxu0 0.0
    %682 = vmatprep.subr.mxu0 0.0
    %683 = vmatpush1.msra.mxu0 0.0
    %684 = vmatprep.subr.mxu0 0.0
    %685 = vmatpush1.msra.mxu0 0.0
    %686 = vmatprep.subr.mxu0 0.0
    %687 = vmatpush1.msra.mxu0 0.0
    %688 = vmatprep.subr.mxu0 0.0
    %689 = vmatpush1.msra.mxu0 0.0
    %690 = vmatprep.subr.mxu0 0.0
    %691 = vmatpush1.msra.mxu0 0.0
    %692 = vmatprep.subr.mxu0 0.0
    %693 = vmatpush1.msra.mxu0 0.0
    %694 = vmatprep.subr.mxu0 0.0
    %695 = vmatpush1.msra.mxu0 0.0
    %696 = vmatprep.subr.mxu0 0.0
    %697 = vmatpush1.msra.mxu0 0.0
    %698 = vmatprep.subr.mxu0 0.0
    %699 = vmatpush1.msra.mxu0 0.0
    %700 = vmatprep.subr.mxu0 0.0
    %701 = vmatpush1.msra.mxu0 0.0
    %702 = vmatprep.subr.mxu0 0.0
    %703 = vmatpush1.msra.mxu0 0.0
    %704 = vmatprep.subr.mxu0 0.0
    %705 = vmatpush1.msra.mxu0 0.0
    %706 = vmatprep.subr.mxu0 0.0
    %707 = vmatpush1.msra.mxu0 0.0
    %708 = vmatprep.subr.mxu0 0.0
    %709 = vmatpush1.msra.mxu0 0.0
    %710 = vmatprep.subr.mxu0 0.0
    %711 = vmatpush1.msra.mxu0 0.0
    %712 = vmatprep.subr.mxu0 0.0
    %713 = vmatpush1.msra.mxu0 0.0
    %714 = vmatprep.mubr.f32.mxu0 0.0
    %v715 = vand.u32 %v62, 4294901760
    %716 = vmatmul.mubr.f32.gmra.mrb[0].mxu0 %v715
    %v717 = vpop.f32.mrb[0].mxu0
    %v718 = vadd.f32 %v621, %v717
    %v719 = vpop.f32.mrb[0].mxu0
    %720 = vmatprep.mubr.f32.mxu0 0.0
    %v721 = vand.u32 %v65, 4294901760
    %722 = vmatmul.mubr.f32.gmra.mrb[0].mxu0 %v721
    %v723 = vpop.f32.mrb[0].mxu0
    %v724 = vadd.f32 %v627, %v723
    %v725 = vpop.f32.mrb[0].mxu0
    %726 = vmatprep.mubr.f32.mxu0 0.0
    %v727 = vand.u32 %v68, 4294901760
    %728 = vmatmul.mubr.f32.gmra.mrb[0].mxu0 %v727
    %v729 = vpop.f32.mrb[0].mxu0
    %v730 = vadd.f32 %v633, %v729
    %v731 = vpop.f32.mrb[0].mxu0
    %732 = vmatprep.mubr.f32.mxu0 0.0
    %v733 = vand.u32 %v71, 4294901760
    %734 = vmatmul.mubr.f32.gmra.mrb[0].mxu0 %v733
    %v735 = vpop.f32.mrb[0].mxu0
    %v736 = vadd.f32 %v639, %v735
    %v737 = vpop.f32.mrb[0].mxu0
    %738 = vdwg.mxu0
    %v739 = vmul.f32 %v718, %v718
    %v740 = vmul.f32 %v724, %v724
    %v741 = vmul.f32 %v730, %v730
    %v742 = vmul.f32 %v736, %v736
    %v743 = vadd.f32 %v739, %v740
    %v744 = vrot.slane %v743, 4
    %v745 = vadd.f32 %v743, %v744
    %v746 = vrot.slane %v745, 2
    %v747 = vadd.f32 %v745, %v746
    %v748 = vrot.slane %v747, 1
    %v749 = vadd.f32 %v747, %v748
    %v750 = vadd.f32 %v741, %v742
    %v751 = vrot.slane %v750, 4
    %v752 = vadd.f32 %v750, %v751
    %v753 = vrot.slane %v752, 2
    %v754 = vadd.f32 %v752, %v753
    %v755 = vrot.slane %v754, 1
    %v756 = vadd.f32 %v754, %v755
    %vm759 = vcmask 1041409
    %v760 = vsel %vm759, %v756, %v749
    %vm762 = vcmask 254976
    %v763 = vsel %vm762, %v760, 0.0
    %764 = vadd.xlane.f32.xlu0 %v763
    %v765 = vpop.xlane.xlu0 %764
    %v766 = vmul.f32 %v765, -0.001953125
    %767 = vrot.lane.b32.xlu0 %v760, 96
    %v768 = vpop.permute.xlu0 %767
    %v770 = vsel %vm762, %v768, 0.0
    %771 = vadd.xlane.f32.xlu0 %v770
    %v772 = vpop.xlane.xlu0 %771
    %v773 = vmul.f32 %v772, -0.001953125
    %774 = vrot.lane.b32.xlu0 %v760, 64
    %v775 = vpop.permute.xlu0 %774
    %v777 = vsel %vm762, %v775, 0.0
    %778 = vadd.xlane.f32.xlu0 %v777
    %v779 = vpop.xlane.xlu0 %778
    %v780 = vmul.f32 %v779, -0.001953125
    %781 = vrot.lane.b32.xlu0 %v760, 32
    %v782 = vpop.permute.xlu0 %781
    %v784 = vsel %vm762, %v782, 0.0
    %785 = vadd.xlane.f32.xlu0 %v784
    %v786 = vpop.xlane.xlu0 %785
    %v787 = vmul.f32 %v786, -0.001953125
    %vm788 = vcmask 7168
    %v789 = vsel %vm788, %v766, %v773
    %vm790 = vcmask 15360
    %v791 = vsel %vm790, %v789, %v780
    %vm792 = vcmask 23552
    %v793 = vsel %vm792, %v791, %v787
    %v794 = vld [vmem:[%s2] sm:$0xf]
    %vm795 = vcmask 31744
    %v797 = vsel %vm795, %v793, 0
    %vm799 = vcmask 1043456
    %v801 = vsel %vm799, %v794, 0
    %803 = vmatprep.subr.mxu0 0.0
    %v804 = vand.u32 %v801, 4294901760
    %805 = vmatpush1.msra.mxu0 %v804
    %806 = vmatprep.subr.mxu0 0.0
    %807 = vmatpush1.msra.mxu0 0.0
    %808 = vmatprep.subr.mxu0 0.0
    %809 = vmatpush1.msra.mxu0 0.0
    %810 = vmatprep.subr.mxu0 0.0
    %811 = vmatpush1.msra.mxu0 0.0
    %812 = vmatprep.subr.mxu0 0.0
    %813 = vmatpush1.msra.mxu0 0.0
    %814 = vmatprep.subr.mxu0 0.0
    %815 = vmatpush1.msra.mxu0 0.0
    %816 = vmatprep.subr.mxu0 0.0
    %817 = vmatpush1.msra.mxu0 0.0
    %818 = vmatprep.subr.mxu0 0.0
    %819 = vmatpush1.msra.mxu0 0.0
    %820 = vmatprep.subr.mxu0 0.0
    %821 = vmatpush1.msra.mxu0 0.0
    %822 = vmatprep.subr.mxu0 0.0
    %823 = vmatpush1.msra.mxu0 0.0
    %824 = vmatprep.subr.mxu0 0.0
    %825 = vmatpush1.msra.mxu0 0.0
    %826 = vmatprep.subr.mxu0 0.0
    %827 = vmatpush1.msra.mxu0 0.0
    %828 = vmatprep.subr.mxu0 0.0
    %829 = vmatpush1.msra.mxu0 0.0
    %830 = vmatprep.subr.mxu0 0.0
    %831 = vmatpush1.msra.mxu0 0.0
    %832 = vmatprep.subr.mxu0 0.0
    %833 = vmatpush1.msra.mxu0 0.0
    %834 = vmatprep.subr.mxu0 0.0
    %835 = vmatpush1.msra.mxu0 0.0
    %836 = vmatprep.subr.mxu0 0.0
    %837 = vmatpush1.msra.mxu0 0.0
    %838 = vmatprep.subr.mxu0 0.0
    %839 = vmatpush1.msra.mxu0 0.0
    %840 = vmatprep.subr.mxu0 0.0
    %841 = vmatpush1.msra.mxu0 0.0
    %842 = vmatprep.subr.mxu0 0.0
    %843 = vmatpush1.msra.mxu0 0.0
    %844 = vmatprep.subr.mxu0 0.0
    %845 = vmatpush1.msra.mxu0 0.0
    %846 = vmatprep.subr.mxu0 0.0
    %847 = vmatpush1.msra.mxu0 0.0
    %848 = vmatprep.subr.mxu0 0.0
    %849 = vmatpush1.msra.mxu0 0.0
    %850 = vmatprep.subr.mxu0 0.0
    %851 = vmatpush1.msra.mxu0 0.0
    %852 = vmatprep.subr.mxu0 0.0
    %853 = vmatpush1.msra.mxu0 0.0
    %854 = vmatprep.subr.mxu0 0.0
    %855 = vmatpush1.msra.mxu0 0.0
    %856 = vmatprep.subr.mxu0 0.0
    %857 = vmatpush1.msra.mxu0 0.0
    %858 = vmatprep.subr.mxu0 0.0
    %859 = vmatpush1.msra.mxu0 0.0
    %860 = vmatprep.subr.mxu0 0.0
    %861 = vmatpush1.msra.mxu0 0.0
    %862 = vmatprep.subr.mxu0 0.0
    %863 = vmatpush1.msra.mxu0 0.0
    %864 = vmatprep.subr.mxu0 0.0
    %865 = vmatpush1.msra.mxu0 0.0
    %866 = vmatprep.subr.mxu0 0.0
    %867 = vmatpush1.msra.mxu0 0.0
    %868 = vmatprep.mubr.f32.mxu0 0.0
    %v869 = vand.u32 %v797, 4294901760
    %v870 = vsub.f32 %v797, %v869
    %v871 = vand.u32 %v870, 4294901760
    %v872 = vsub.f32 %v870, %v871
    %v873 = vand.u32 %v872, 4294901760
    %874 = vmatmul.mubr.f32.gmra.mrb[0].mxu0 %v873
    %v875 = vpop.f32.mrb[0].mxu0
    %v876 = vadd.f32 0.0, %v875
    %v877 = vpop.f32.mrb[0].mxu0
    %878 = vdwg.mxu0
    %879 = vmatprep.subr.mxu0 0.0
    %v880 = vand.u32 %v801, 4294901760
    %v881 = vsub.f32 %v801, %v880
    %v882 = vand.u32 %v881, 4294901760
    %v883 = vsub.f32 %v881, %v882
    %v884 = vand.u32 %v883, 4294901760
    %885 = vmatpush1.msra.mxu0 %v884
    %886 = vmatprep.subr.mxu0 0.0
    %887 = vmatpush1.msra.mxu0 0.0
    %888 = vmatprep.subr.mxu0 0.0
    %889 = vmatpush1.msra.mxu0 0.0
    %890 = vmatprep.subr.mxu0 0.0
    %891 = vmatpush1.msra.mxu0 0.0
    %892 = vmatprep.subr.mxu0 0.0
    %893 = vmatpush1.msra.mxu0 0.0
    %894 = vmatprep.subr.mxu0 0.0
    %895 = vmatpush1.msra.mxu0 0.0
    %896 = vmatprep.subr.mxu0 0.0
    %897 = vmatpush1.msra.mxu0 0.0
    %898 = vmatprep.subr.mxu0 0.0
    %899 = vmatpush1.msra.mxu0 0.0
    %900 = vmatprep.subr.mxu0 0.0
    %901 = vmatpush1.msra.mxu0 0.0
    %902 = vmatprep.subr.mxu0 0.0
    %903 = vmatpush1.msra.mxu0 0.0
    %904 = vmatprep.subr.mxu0 0.0
    %905 = vmatpush1.msra.mxu0 0.0
    %906 = vmatprep.subr.mxu0 0.0
    %907 = vmatpush1.msra.mxu0 0.0
    %908 = vmatprep.subr.mxu0 0.0
    %909 = vmatpush1.msra.mxu0 0.0
    %910 = vmatprep.subr.mxu0 0.0
    %911 = vmatpush1.msra.mxu0 0.0
    %912 = vmatprep.subr.mxu0 0.0
    %913 = vmatpush1.msra.mxu0 0.0
    %914 = vmatprep.subr.mxu0 0.0
    %915 = vmatpush1.msra.mxu0 0.0
    %916 = vmatprep.subr.mxu0 0.0
    %917 = vmatpush1.msra.mxu0 0.0
    %918 = vmatprep.subr.mxu0 0.0
    %919 = vmatpush1.msra.mxu0 0.0
    %920 = vmatprep.subr.mxu0 0.0
    %921 = vmatpush1.msra.mxu0 0.0
    %922 = vmatprep.subr.mxu0 0.0
    %923 = vmatpush1.msra.mxu0 0.0
    %924 = vmatprep.subr.mxu0 0.0
    %925 = vmatpush1.msra.mxu0 0.0
    %926 = vmatprep.subr.mxu0 0.0
    %927 = vmatpush1.msra.mxu0 0.0
    %928 = vmatprep.subr.mxu0 0.0
    %929 = vmatpush1.msra.mxu0 0.0
    %930 = vmatprep.subr.mxu0 0.0
    %931 = vmatpush1.msra.mxu0 0.0
    %932 = vmatprep.subr.mxu0 0.0
    %933 = vmatpush1.msra.mxu0 0.0
    %934 = vmatprep.subr.mxu0 0.0
    %935 = vmatpush1.msra.mxu0 0.0
    %936 = vmatprep.subr.mxu0 0.0
    %937 = vmatpush1.msra.mxu0 0.0
    %938 = vmatprep.subr.mxu0 0.0
    %939 = vmatpush1.msra.mxu0 0.0
    %940 = vmatprep.subr.mxu0 0.0
    %941 = vmatpush1.msra.mxu0 0.0
    %942 = vmatprep.subr.mxu0 0.0
    %943 = vmatpush1.msra.mxu0 0.0
    %944 = vmatprep.subr.mxu0 0.0
    %945 = vmatpush1.msra.mxu0 0.0
    %946 = vmatprep.subr.mxu0 0.0
    %947 = vmatpush1.msra.mxu0 0.0
    %948 = vmatprep.mubr.f32.mxu0 0.0
    %v949 = vand.u32 %v797, 4294901760
    %950 = vmatmul.mubr.f32.gmra.mrb[0].mxu0 %v949
    %v951 = vpop.f32.mrb[0].mxu0
    %v952 = vadd.f32 %v876, %v951
    %v953 = vpop.f32.mrb[0].mxu0
    %954 = vdwg.mxu0
    %955 = vmatprep.subr.mxu0 0.0
    %v956 = vand.u32 %v801, 4294901760
    %v957 = vsub.f32 %v801, %v956
    %958 = vmatpush1.msra.mxu0 %v957
    %959 = vmatprep.subr.mxu0 0.0
    %960 = vmatpush1.msra.mxu0 0.0
    %961 = vmatprep.subr.mxu0 0.0
    %962 = vmatpush1.msra.mxu0 0.0
    %963 = vmatprep.subr.mxu0 0.0
    %964 = vmatpush1.msra.mxu0 0.0
    %965 = vmatprep.subr.mxu0 0.0
    %966 = vmatpush1.msra.mxu0 0.0
    %967 = vmatprep.subr.mxu0 0.0
    %968 = vmatpush1.msra.mxu0 0.0
    %969 = vmatprep.subr.mxu0 0.0
    %970 = vmatpush1.msra.mxu0 0.0
    %971 = vmatprep.subr.mxu0 0.0
    %972 = vmatpush1.msra.mxu0 0.0
    %973 = vmatprep.subr.mxu0 0.0
    %974 = vmatpush1.msra.mxu0 0.0
    %975 = vmatprep.subr.mxu0 0.0
    %976 = vmatpush1.msra.mxu0 0.0
    %977 = vmatprep.subr.mxu0 0.0
    %978 = vmatpush1.msra.mxu0 0.0
    %979 = vmatprep.subr.mxu0 0.0
    %980 = vmatpush1.msra.mxu0 0.0
    %981 = vmatprep.subr.mxu0 0.0
    %982 = vmatpush1.msra.mxu0 0.0
    %983 = vmatprep.subr.mxu0 0.0
    %984 = vmatpush1.msra.mxu0 0.0
    %985 = vmatprep.subr.mxu0 0.0
    %986 = vmatpush1.msra.mxu0 0.0
    %987 = vmatprep.subr.mxu0 0.0
    %988 = vmatpush1.msra.mxu0 0.0
    %989 = vmatprep.subr.mxu0 0.0
    %990 = vmatpush1.msra.mxu0 0.0
    %991 = vmatprep.subr.mxu0 0.0
    %992 = vmatpush1.msra.mxu0 0.0
    %993 = vmatprep.subr.mxu0 0.0
    %994 = vmatpush1.msra.mxu0 0.0
    %995 = vmatprep.subr.mxu0 0.0
    %996 = vmatpush1.msra.mxu0 0.0
    %997 = vmatprep.subr.mxu0 0.0
    %998 = vmatpush1.msra.mxu0 0.0
    %999 = vmatprep.subr.mxu0 0.0
    %1000 = vmatpush1.msra.mxu0 0.0
    %1001 = vmatprep.subr.mxu0 0.0
    %1002 = vmatpush1.msra.mxu0 0.0
    %1003 = vmatprep.subr.mxu0 0.0
    %1004 = vmatpush1.msra.mxu0 0.0
    %1005 = vmatprep.subr.mxu0 0.0
    %1006 = vmatpush1.msra.mxu0 0.0
    %1007 = vmatprep.subr.mxu0 0.0
    %1008 = vmatpush1.msra.mxu0 0.0
    %1009 = vmatprep.subr.mxu0 0.0
    %1010 = vmatpush1.msra.mxu0 0.0
    %1011 = vmatprep.subr.mxu0 0.0
    %1012 = vmatpush1.msra.mxu0 0.0
    %1013 = vmatprep.subr.mxu0 0.0
    %1014 = vmatpush1.msra.mxu0 0.0
    %1015 = vmatprep.subr.mxu0 0.0
    %1016 = vmatpush1.msra.mxu0 0.0
    %1017 = vmatprep.subr.mxu0 0.0
    %1018 = vmatpush1.msra.mxu0 0.0
    %1019 = vmatprep.subr.mxu0 0.0
    %1020 = vmatpush1.msra.mxu0 0.0
    %1021 = vmatprep.mubr.f32.mxu0 0.0
    %v1022 = vand.u32 %v797, 4294901760
    %v1023 = vsub.f32 %v797, %v1022
    %1024 = vmatmul.mubr.f32.gmra.mrb[0].mxu0 %v1023
    %v1025 = vpop.f32.mrb[0].mxu0
    %v1026 = vadd.f32 %v952, %v1025
    %v1027 = vpop.f32.mrb[0].mxu0
    %1028 = vdwg.mxu0
    %1029 = vmatprep.subr.mxu0 0.0
    %v1030 = vand.u32 %v801, 4294901760
    %1031 = vmatpush1.msra.mxu0 %v1030
    %1032 = vmatprep.subr.mxu0 0.0
    %1033 = vmatpush1.msra.mxu0 0.0
    %1034 = vmatprep.subr.mxu0 0.0
    %1035 = vmatpush1.msra.mxu0 0.0
    %1036 = vmatprep.subr.mxu0 0.0
    %1037 = vmatpush1.msra.mxu0 0.0
    %1038 = vmatprep.subr.mxu0 0.0
    %1039 = vmatpush1.msra.mxu0 0.0
    %1040 = vmatprep.subr.mxu0 0.0
    %1041 = vmatpush1.msra.mxu0 0.0
    %1042 = vmatprep.subr.mxu0 0.0
    %1043 = vmatpush1.msra.mxu0 0.0
    %1044 = vmatprep.subr.mxu0 0.0
    %1045 = vmatpush1.msra.mxu0 0.0
    %1046 = vmatprep.subr.mxu0 0.0
    %1047 = vmatpush1.msra.mxu0 0.0
    %1048 = vmatprep.subr.mxu0 0.0
    %1049 = vmatpush1.msra.mxu0 0.0
    %1050 = vmatprep.subr.mxu0 0.0
    %1051 = vmatpush1.msra.mxu0 0.0
    %1052 = vmatprep.subr.mxu0 0.0
    %1053 = vmatpush1.msra.mxu0 0.0
    %1054 = vmatprep.subr.mxu0 0.0
    %1055 = vmatpush1.msra.mxu0 0.0
    %1056 = vmatprep.subr.mxu0 0.0
    %1057 = vmatpush1.msra.mxu0 0.0
    %1058 = vmatprep.subr.mxu0 0.0
    %1059 = vmatpush1.msra.mxu0 0.0
    %1060 = vmatprep.subr.mxu0 0.0
    %1061 = vmatpush1.msra.mxu0 0.0
    %1062 = vmatprep.subr.mxu0 0.0
    %1063 = vmatpush1.msra.mxu0 0.0
    %1064 = vmatprep.subr.mxu0 0.0
    %1065 = vmatpush1.msra.mxu0 0.0
    %1066 = vmatprep.subr.mxu0 0.0
    %1067 = vmatpush1.msra.mxu0 0.0
    %1068 = vmatprep.subr.mxu0 0.0
    %1069 = vmatpush1.msra.mxu0 0.0
    %1070 = vmatprep.subr.mxu0 0.0
    %1071 = vmatpush1.msra.mxu0 0.0
    %1072 = vmatprep.subr.mxu0 0.0
    %1073 = vmatpush1.msra.mxu0 0.0
    %1074 = vmatprep.subr.mxu0 0.0
    %1075 = vmatpush1.msra.mxu0 0.0
    %1076 = vmatprep.subr.mxu0 0.0
    %1077 = vmatpush1.msra.mxu0 0.0
    %1078 = vmatprep.subr.mxu0 0.0
    %1079 = vmatpush1.msra.mxu0 0.0
    %1080 = vmatprep.subr.mxu0 0.0
    %1081 = vmatpush1.msra.mxu0 0.0
    %1082 = vmatprep.subr.mxu0 0.0
    %1083 = vmatpush1.msra.mxu0 0.0
    %1084 = vmatprep.subr.mxu0 0.0
    %1085 = vmatpush1.msra.mxu0 0.0
    %1086 = vmatprep.subr.mxu0 0.0
    %1087 = vmatpush1.msra.mxu0 0.0
    %1088 = vmatprep.subr.mxu0 0.0
    %1089 = vmatpush1.msra.mxu0 0.0
    %1090 = vmatprep.subr.mxu0 0.0
    %1091 = vmatpush1.msra.mxu0 0.0
    %1092 = vmatprep.subr.mxu0 0.0
    %1093 = vmatpush1.msra.mxu0 0.0
    %1094 = vmatprep.mubr.f32.mxu0 0.0
    %v1095 = vand.u32 %v797, 4294901760
    %v1096 = vsub.f32 %v797, %v1095
    %v1097 = vand.u32 %v1096, 4294901760
    %1098 = vmatmul.mubr.f32.gmra.mrb[0].mxu0 %v1097
    %v1099 = vpop.f32.mrb[0].mxu0
    %v1100 = vadd.f32 %v1026, %v1099
    %v1101 = vpop.f32.mrb[0].mxu0
    %1102 = vdwg.mxu0
    %1103 = vmatprep.subr.mxu0 0.0
    %v1104 = vand.u32 %v801, 4294901760
    %v1105 = vsub.f32 %v801, %v1104
    %v1106 = vand.u32 %v1105, 4294901760
    %1107 = vmatpush1.msra.mxu0 %v1106
    %1108 = vmatprep.subr.mxu0 0.0
    %1109 = vmatpush1.msra.mxu0 0.0
    %1110 = vmatprep.subr.mxu0 0.0
    %1111 = vmatpush1.msra.mxu0 0.0
    %1112 = vmatprep.subr.mxu0 0.0
    %1113 = vmatpush1.msra.mxu0 0.0
    %1114 = vmatprep.subr.mxu0 0.0
    %1115 = vmatpush1.msra.mxu0 0.0
    %1116 = vmatprep.subr.mxu0 0.0
    %1117 = vmatpush1.msra.mxu0 0.0
    %1118 = vmatprep.subr.mxu0 0.0
    %1119 = vmatpush1.msra.mxu0 0.0
    %1120 = vmatprep.subr.mxu0 0.0
    %1121 = vmatpush1.msra.mxu0 0.0
    %1122 = vmatprep.subr.mxu0 0.0
    %1123 = vmatpush1.msra.mxu0 0.0
    %1124 = vmatprep.subr.mxu0 0.0
    %1125 = vmatpush1.msra.mxu0 0.0
    %1126 = vmatprep.subr.mxu0 0.0
    %1127 = vmatpush1.msra.mxu0 0.0
    %1128 = vmatprep.subr.mxu0 0.0
    %1129 = vmatpush1.msra.mxu0 0.0
    %1130 = vmatprep.subr.mxu0 0.0
    %1131 = vmatpush1.msra.mxu0 0.0
    %1132 = vmatprep.subr.mxu0 0.0
    %1133 = vmatpush1.msra.mxu0 0.0
    %1134 = vmatprep.subr.mxu0 0.0
    %1135 = vmatpush1.msra.mxu0 0.0
    %1136 = vmatprep.subr.mxu0 0.0
    %1137 = vmatpush1.msra.mxu0 0.0
    %1138 = vmatprep.subr.mxu0 0.0
    %1139 = vmatpush1.msra.mxu0 0.0
    %1140 = vmatprep.subr.mxu0 0.0
    %1141 = vmatpush1.msra.mxu0 0.0
    %1142 = vmatprep.subr.mxu0 0.0
    %1143 = vmatpush1.msra.mxu0 0.0
    %1144 = vmatprep.subr.mxu0 0.0
    %1145 = vmatpush1.msra.mxu0 0.0
    %1146 = vmatprep.subr.mxu0 0.0
    %1147 = vmatpush1.msra.mxu0 0.0
    %1148 = vmatprep.subr.mxu0 0.0
    %1149 = vmatpush1.msra.mxu0 0.0
    %1150 = vmatprep.subr.mxu0 0.0
    %1151 = vmatpush1.msra.mxu0 0.0
    %1152 = vmatprep.subr.mxu0 0.0
    %1153 = vmatpush1.msra.mxu0 0.0
    %1154 = vmatprep.subr.mxu0 0.0
    %1155 = vmatpush1.msra.mxu0 0.0
    %1156 = vmatprep.subr.mxu0 0.0
    %1157 = vmatpush1.msra.mxu0 0.0
    %1158 = vmatprep.subr.mxu0 0.0
    %1159 = vmatpush1.msra.mxu0 0.0
    %1160 = vmatprep.subr.mxu0 0.0
    %1161 = vmatpush1.msra.mxu0 0.0
    %1162 = vmatprep.subr.mxu0 0.0
    %1163 = vmatpush1.msra.mxu0 0.0
    %1164 = vmatprep.subr.mxu0 0.0
    %1165 = vmatpush1.msra.mxu0 0.0
    %1166 = vmatprep.subr.mxu0 0.0
    %1167 = vmatpush1.msra.mxu0 0.0
    %1168 = vmatprep.subr.mxu0 0.0
    %1169 = vmatpush1.msra.mxu0 0.0
    %1170 = vmatprep.mubr.f32.mxu0 0.0
    %v1171 = vand.u32 %v797, 4294901760
    %1172 = vmatmul.mubr.f32.gmra.mrb[0].mxu0 %v1171
    %v1173 = vpop.f32.mrb[0].mxu0
    %v1174 = vadd.f32 %v1100, %v1173
    %v1175 = vpop.f32.mrb[0].mxu0
    %1176 = vdwg.mxu0
    %1177 = vmatprep.subr.mxu0 0.0
    %v1178 = vand.u32 %v801, 4294901760
    %1179 = vmatpush1.msra.mxu0 %v1178
    %1180 = vmatprep.subr.mxu0 0.0
    %1181 = vmatpush1.msra.mxu0 0.0
    %1182 = vmatprep.subr.mxu0 0.0
    %1183 = vmatpush1.msra.mxu0 0.0
    %1184 = vmatprep.subr.mxu0 0.0
    %1185 = vmatpush1.msra.mxu0 0.0
    %1186 = vmatprep.subr.mxu0 0.0
    %1187 = vmatpush1.msra.mxu0 0.0
    %1188 = vmatprep.subr.mxu0 0.0
    %1189 = vmatpush1.msra.mxu0 0.0
    %1190 = vmatprep.subr.mxu0 0.0
    %1191 = vmatpush1.msra.mxu0 0.0
    %1192 = vmatprep.subr.mxu0 0.0
    %1193 = vmatpush1.msra.mxu0 0.0
    %1194 = vmatprep.subr.mxu0 0.0
    %1195 = vmatpush1.msra.mxu0 0.0
    %1196 = vmatprep.subr.mxu0 0.0
    %1197 = vmatpush1.msra.mxu0 0.0
    %1198 = vmatprep.subr.mxu0 0.0
    %1199 = vmatpush1.msra.mxu0 0.0
    %1200 = vmatprep.subr.mxu0 0.0
    %1201 = vmatpush1.msra.mxu0 0.0
    %1202 = vmatprep.subr.mxu0 0.0
    %1203 = vmatpush1.msra.mxu0 0.0
    %1204 = vmatprep.subr.mxu0 0.0
    %1205 = vmatpush1.msra.mxu0 0.0
    %1206 = vmatprep.subr.mxu0 0.0
    %1207 = vmatpush1.msra.mxu0 0.0
    %1208 = vmatprep.subr.mxu0 0.0
    %1209 = vmatpush1.msra.mxu0 0.0
    %1210 = vmatprep.subr.mxu0 0.0
    %1211 = vmatpush1.msra.mxu0 0.0
    %1212 = vmatprep.subr.mxu0 0.0
    %1213 = vmatpush1.msra.mxu0 0.0
    %1214 = vmatprep.subr.mxu0 0.0
    %1215 = vmatpush1.msra.mxu0 0.0
    %1216 = vmatprep.subr.mxu0 0.0
    %1217 = vmatpush1.msra.mxu0 0.0
    %1218 = vmatprep.subr.mxu0 0.0
    %1219 = vmatpush1.msra.mxu0 0.0
    %1220 = vmatprep.subr.mxu0 0.0
    %1221 = vmatpush1.msra.mxu0 0.0
    %1222 = vmatprep.subr.mxu0 0.0
    %1223 = vmatpush1.msra.mxu0 0.0
    %1224 = vmatprep.subr.mxu0 0.0
    %1225 = vmatpush1.msra.mxu0 0.0
    %1226 = vmatprep.subr.mxu0 0.0
    %1227 = vmatpush1.msra.mxu0 0.0
    %1228 = vmatprep.subr.mxu0 0.0
    %1229 = vmatpush1.msra.mxu0 0.0
    %1230 = vmatprep.subr.mxu0 0.0
    %1231 = vmatpush1.msra.mxu0 0.0
    %1232 = vmatprep.subr.mxu0 0.0
    %1233 = vmatpush1.msra.mxu0 0.0
    %1234 = vmatprep.subr.mxu0 0.0
    %1235 = vmatpush1.msra.mxu0 0.0
    %1236 = vmatprep.subr.mxu0 0.0
    %1237 = vmatpush1.msra.mxu0 0.0
    %1238 = vmatprep.subr.mxu0 0.0
    %1239 = vmatpush1.msra.mxu0 0.0
    %1240 = vmatprep.subr.mxu0 0.0
    %1241 = vmatpush1.msra.mxu0 0.0
    %1242 = vmatprep.mubr.f32.mxu0 0.0
    %v1243 = vand.u32 %v797, 4294901760
    %1244 = vmatmul.mubr.f32.gmra.mrb[0].mxu0 %v1243
    %v1245 = vpop.f32.mrb[0].mxu0
    %v1246 = vadd.f32 %v1174, %v1245
    %v1247 = vpop.f32.mrb[0].mxu0
    %1248 = vdwg.mxu0
    %v1249 = vld [vmem:[%s3] sm:$0x1]
    %v1251 = vlaneseq
    %v1252 = vshrl.u32 %v1251, 7
    %v1253 = vsub.s32 0, %v1252
    %v1254 = vrot.slane %v1249, %v1253
    %v1256 = vsub.f32 %v1246, %v1254
    %v1257 = vmul.f32 %v1256, %v1256
    %vm1258 = vcmask 25600
    %v1259 = vsel %vm1258, %v1257, 0.0
    %1260 = vadd.xlane.f32.xlu0 %v1259
    %v1261 = vpop.xlane.xlu0 %1260
    %1263 = vrot.lane.b32.xlu0 %v1257, 124
    %v1264 = vpop.permute.xlu0 %1263
    %v1266 = vsel %vm1258, %v1264, 0.0
    %1267 = vadd.xlane.f32.xlu0 %v1266
    %v1268 = vpop.xlane.xlu0 %1267
    %1269 = vrot.lane.b32.xlu0 %v1257, 120
    %v1270 = vpop.permute.xlu0 %1269
    %v1272 = vsel %vm1258, %v1270, 0.0
    %1273 = vadd.xlane.f32.xlu0 %v1272
    %v1274 = vpop.xlane.xlu0 %1273
    %v1275 = vsel %vm788, %v1261, %v1268
    %v1276 = vsel %vm790, %v1275, %v1274
    %v1277 = vld [vmem:[%s4] sm:$0x1]
    %v1278 = vmul.f32 %v1276, 0.5
    %v1280 = vlaneseq
    %v1281 = vshrl.u32 %v1280, 7
    %v1282 = vsub.s32 0, %v1281
    %v1283 = vrot.slane %v1277, %v1282
    %v1285 = vsub.f32 %v1283, %v1278
    %vm1286 = vcmask 17408
    %v1287 = vsel %vm1286, %v1285, -inf
    %1288 = vmax.xlane.f32.xlu0 %v1287
    %v1289 = vpop.xlane.xlu0 %1288
    %v1290 = vsub.f32 %v1285, %v1289
    %v1291 = vmul.f32 %v1290, 1.442695
    %v1292 = vpow.pop %v1291
    %v1293 = vsel %vm1286, %v1292, 0.0
    %1294 = vadd.xlane.f32.xlu0 %v1293
    %v1295 = vpop.xlane.xlu0 %1294
    %v1296 = vlog2.pop %v1295
    %v1297 = vmul.f32 %v1296, 0.6931472
    %v1298 = vadd.f32 %v1289, %v1297
    %vm1299 = vcmask 1024
    %1300 = vst.msk [vmem:[%s5] sm:$0x3] %vm1299, %v1298
    // Predicated region
    $region30: #{tpu_custom_call.1} parent=1 // pred_check
      _
    $region31: #{tpu_custom_call.1} parent=1 // pred_check_branch
      %1302 = sbr.rel (0) target = $region33
    $region32: #{tpu_custom_call.1} parent=1 // pred_region
      _
    $region33: #{tpu_custom_call.1} parent=1 // pred_fallthru
      _
    // Predicated region
    $region34: #{tpu_custom_call.1} parent=1 // pred_check
      _
    $region35: #{tpu_custom_call.1} parent=1 // pred_check_branch
      %1304 = sbr.rel (0) target = $region37
    $region36: #{tpu_custom_call.1} parent=1 // pred_region
      _
    $region37: #{tpu_custom_call.1} parent=1 // pred_fallthru
      _
    %1305 = vsyncpa [#allocation3], 1
    %1306 = vsyncpa [#allocation5], 1

</llo_original>
